<compile_context>
chip_gen: v7x
topology: tpu7x:2x2x1
jax: 0.10.0
libtpu: 0.0.40
codegen_flags: <defaults>
</compile_context>

<pallas_src>
import jax
import jax.numpy as jnp
from jax.experimental import pallas as pl
from jax.experimental.pallas import tpu as pltpu

LOG_STD_MAX = 2.0
LOG_STD_MIN = -5.0


def _policy_mlp_kernel(xT_ref, w1T_ref, b1_ref, w2T_ref, b2_ref, w3T_ref, b3_ref,
                       meanT_ref):
    """One batch tile, transposed layout: activations are (features, tb) so the
    batch sits on the 128-lane axis. Matmul inputs are in the compute dtype
    (bf16); accumulation / bias / ReLU are f32."""
    cd = w1T_ref.dtype                                   # MXU compute dtype (bf16)
    xT = xT_ref[...]                                     # (obs_dim, tb)

    h1 = jnp.dot(w1T_ref[...], xT, preferred_element_type=jnp.float32) + b1_ref[...]
    h1 = jnp.maximum(h1, 0.0)                            # (hidden, tb) f32

    h2 = jnp.dot(w2T_ref[...], h1.astype(cd),
                 preferred_element_type=jnp.float32) + b2_ref[...]
    h2 = jnp.maximum(h2, 0.0)                            # (hidden, tb) f32

    m = jnp.dot(w3T_ref[...], h2.astype(cd),
                preferred_element_type=jnp.float32) + b3_ref[...]
    meanT_ref[...] = m.astype(meanT_ref.dtype)           # (act_dim, tb)


def _cdiv(a, b):
    return (a + b - 1) // b


def _round_up(x, m):
    return ((x + m - 1) // m) * m


def _choose_block_b(B, obs_dim, hidden, act_dim, in_itemsize,
                    vmem_budget_bytes=16 << 20, max_tb=32 * 1024):
    """Batch tile (columns, multiple of 128 lanes) that fits a conservative VMEM
    budget valid on v5e/v6e (128 MiB) and v7x (64 MiB physical / 32 MiB scoped)."""
    weight_bytes = (in_itemsize * (obs_dim * hidden + hidden * hidden + hidden * act_dim)
                    + 4 * (2 * hidden + act_dim))
    per_col = (2 * obs_dim * in_itemsize       # double-buffered obs^T tile
               + 2 * act_dim * 4               # double-buffered mean^T tile (f32)
               + 2 * hidden * (4 + in_itemsize))  # h1/h2 (f32) + their bf16 copies
    tb = (vmem_budget_bytes - weight_bytes) // max(per_col, 1)
    tb = max(128, min(max_tb, (tb // 128) * 128))
    tb = min(tb, _round_up(B, 128))            # don't exceed the (rounded) batch
    if B > 128:
        # v7x has 2 TensorCores; keep >= 2 grid steps so the "parallel" batch
        # axis actually gives the second core work.
        tb = min(tb, max(128, _round_up(_cdiv(B, 2), 128)))
    return int(tb)


_const_index_map = lambda i: (0, 0)     # resident across grid steps (never re-fetched)


def _const_spec(shape):
    """BlockSpec for weights/biases: constant index map; single-buffered when the
    API supports pipeline_mode (no re-fetch → no need for a 2nd VMEM copy)."""
    if hasattr(pl, "Buffered"):
        try:
            return pl.BlockSpec(shape, _const_index_map, pipeline_mode=pl.Buffered(1))
        except TypeError:
            pass
    return pl.BlockSpec(shape, _const_index_map)


def gaussian_policy_forward(obs, params, *, block_b=None, compute_dtype=jnp.bfloat16):
    """Returns (mean, scale_tril) of the MultivariateNormal produced by forward()."""
    w1, b1, w2, b2, w3, b3, log_std = params
    B, obs_dim = obs.shape
    hidden = w1.shape[1]
    act_dim = w3.shape[1]
    in_itemsize = jnp.dtype(compute_dtype).itemsize

    tb = block_b if block_b is not None else _choose_block_b(
        B, obs_dim, hidden, act_dim, in_itemsize)
    tb = max(128, (tb // 128) * 128)           # lane-dense: 128-lane multiples
    if tb >= B:
        tb = B                                 # single full block (full-dim exemption)
    num_tiles = _cdiv(B, tb)

    # Layout plumbing (small copies): batch -> lane axis, weights pre-transposed,
    # MXU inputs cast to compute_dtype (bf16 halves the only large HBM stream).
    obs_t = obs.T.astype(compute_dtype)                          # (obs_dim, B)
    w1_t = w1.T.astype(compute_dtype)                            # (hidden, obs_dim)
    w2_t = w2.T.astype(compute_dtype)                            # (hidden, hidden)
    w3_t = w3.T.astype(compute_dtype)                            # (act_dim, hidden)
    b1_c = jnp.reshape(b1, (hidden, 1)).astype(jnp.float32)
    b2_c = jnp.reshape(b2, (hidden, 1)).astype(jnp.float32)
    b3_c = jnp.reshape(b3, (act_dim, 1)).astype(jnp.float32)

    batch_map = lambda i: (0, i)

    mean_t = pl.pallas_call(
        _policy_mlp_kernel,
        out_shape=jax.ShapeDtypeStruct((act_dim, B), jnp.float32),
        grid=(num_tiles,),
        in_specs=[
            pl.BlockSpec((obs_dim, tb), batch_map),   # obs^T tile (pipelined, lane-dense)
            _const_spec((hidden, obs_dim)),           # W1^T (resident)
            _const_spec((hidden, 1)),                 # b1
            _const_spec((hidden, hidden)),            # W2^T
            _const_spec((hidden, 1)),                 # b2
            _const_spec((act_dim, hidden)),           # W3^T
            _const_spec((act_dim, 1)),                # b3
        ],
        out_specs=pl.BlockSpec((act_dim, tb), batch_map),
        compiler_params=pltpu.CompilerParams(
            dimension_semantics=("parallel",),        # shard batch across TCs on v7x
            vmem_limit_bytes=32 * 1024 * 1024,        # within v7x scoped default
        ),
    )(obs_t, w1_t, b1_c, w2_t, b2_c, w3_t, b3_c)

    mean = mean_t.T                                    # (B, act_dim)

    # scale_tril depends only on the act_dim-sized log_std; plain JAX, not hot path.
    std = jnp.exp(jnp.clip(jnp.reshape(log_std, (-1,)).astype(jnp.float32),
                           LOG_STD_MIN, LOG_STD_MAX))
    scale_tril = jnp.diag(std)
    return mean, scale_tril


def init_params(key, obs_dim, act_dim, hidden_dim):
    """Deterministic synthetic init; weights stored (in, out) f32, biases (out,)."""
    ks = jax.random.split(key, 6)

    def lin(kw, kb, fan_in, fan_out):
        bound = 1.0 / jnp.sqrt(fan_in)
        w = jax.random.uniform(kw, (fan_in, fan_out), jnp.float32, -bound, bound)
        b = jax.random.uniform(kb, (fan_out,), jnp.float32, -bound, bound)
        return w, b

    w1, b1 = lin(ks[0], ks[1], obs_dim, hidden_dim)
    w2, b2 = lin(ks[2], ks[3], hidden_dim, hidden_dim)
    w3, b3 = lin(ks[4], ks[5], hidden_dim, act_dim)
    log_std = jnp.zeros((act_dim,), jnp.float32)   # nn.Parameter(torch.zeros(act_dim))
    return (w1, b1, w2, b2, w3, b3, log_std)


def _reference(obs, params, compute_dtype=jnp.bfloat16):
    """Pure-JAX reference mirroring the kernel's dtype path (bf16 MXU, f32 accum)."""
    w1, b1, w2, b2, w3, b3, log_std = params
    x = obs.astype(compute_dtype)
    h = jnp.maximum(jnp.dot(x, w1.astype(compute_dtype),
                            preferred_element_type=jnp.float32) + b1, 0.0)
    h = jnp.maximum(jnp.dot(h.astype(compute_dtype), w2.astype(compute_dtype),
                            preferred_element_type=jnp.float32) + b2, 0.0)
    mean = jnp.dot(h.astype(compute_dtype), w3.astype(compute_dtype),
                   preferred_element_type=jnp.float32) + b3
    tril = jnp.diag(jnp.exp(jnp.clip(jnp.reshape(log_std, (-1,)),
                                     LOG_STD_MIN, LOG_STD_MAX)))
    return mean, tril


if __name__ == "__main__":
    # Small shapes consistent with the module (act methods index obs[0..3] → obs_dim >= 4).
    B, OBS_DIM, ACT_DIM, HIDDEN = 2, 8, 4, 32

    key = jax.random.PRNGKey(0)
    k_obs, k_params, k_obs2 = jax.random.split(key, 3)
    obs = jax.random.normal(k_obs, (B, OBS_DIM), jnp.float32)
    params = init_params(k_params, OBS_DIM, ACT_DIM, HIDDEN)

    mean, scale_tril = gaussian_policy_forward(obs, params)
    jax.block_until_ready((mean, scale_tril))

    mean_ref, tril_ref = _reference(obs, params)
    assert jnp.allclose(mean, mean_ref, atol=1e-3), "mean mismatch"
    assert jnp.allclose(scale_tril, tril_ref, atol=1e-6), "scale_tril mismatch"

    # Secondary check: batch not a multiple of the tile → exercises the multi-step
    # grid, resident weights, and the masked partial last block (no jnp.pad copy).
    obs2 = jax.random.normal(k_obs2, (300, OBS_DIM), jnp.float32)
    mean2, _ = gaussian_policy_forward(obs2, params, block_b=128)
    jax.block_until_ready(mean2)
    mean2_ref, _ = _reference(obs2, params)
    assert jnp.allclose(mean2, mean2_ref, atol=1e-3), "tiled mean mismatch"

    # TODO(synk): MultivariateNormal sampling and the act()/new_action*()/..._act()
    # exploration branches are host-side, data-dependent control flow + RNG + prints,
    # not part of the forward hot path; not implemented in-kernel.
    print("KERNEL_OK")
</pallas_src>

<mosaic_0001>
module attributes {stable_mosaic.version = 11 : i64} {
  func.func @_policy_mlp_kernel(%arg0: i32, %arg1: memref<8x2xbf16, #tpu.memory_space<vmem>>, %arg2: memref<32x8xbf16, #tpu.memory_space<vmem>>, %arg3: memref<32x1xf32, #tpu.memory_space<vmem>>, %arg4: memref<32x32xbf16, #tpu.memory_space<vmem>>, %arg5: memref<32x1xf32, #tpu.memory_space<vmem>>, %arg6: memref<4x32xbf16, #tpu.memory_space<vmem>>, %arg7: memref<4x1xf32, #tpu.memory_space<vmem>>, %arg8: memref<4x2xf32, #tpu.memory_space<vmem>>) attributes {dimension_semantics = [#tpu.dimension_semantics<parallel>], iteration_bounds = array<i64: 1>, scalar_prefetch = 0 : i64, scratch_operands = 0 : i64, tpu.core_type = #tpu.core_type<tc>, window_params = [{transform_indices = @transform_0, window_bounds = array<i64: 8, 2>}, {pipeline_mode = #tpu.pipeline_mode<synchronous>, transform_indices = @transform_1, window_bounds = array<i64: 32, 8>}, {pipeline_mode = #tpu.pipeline_mode<synchronous>, transform_indices = @transform_2, window_bounds = array<i64: 32, 1>}, {pipeline_mode = #tpu.pipeline_mode<synchronous>, transform_indices = @transform_3, window_bounds = array<i64: 32, 32>}, {pipeline_mode = #tpu.pipeline_mode<synchronous>, transform_indices = @transform_4, window_bounds = array<i64: 32, 1>}, {pipeline_mode = #tpu.pipeline_mode<synchronous>, transform_indices = @transform_5, window_bounds = array<i64: 4, 32>}, {pipeline_mode = #tpu.pipeline_mode<synchronous>, transform_indices = @transform_6, window_bounds = array<i64: 4, 1>}, {transform_indices = @transform_7, window_bounds = array<i64: 4, 2>}]} {
    %c0 = arith.constant 0 : index
    %c0_0 = arith.constant 0 : index
    %0 = vector.load %arg1[%c0, %c0_0] : memref<8x2xbf16, #tpu.memory_space<vmem>>, vector<8x2xbf16>
    %c0_1 = arith.constant 0 : index
    %c0_2 = arith.constant 0 : index
    %1 = vector.load %arg2[%c0_1, %c0_2] : memref<32x8xbf16, #tpu.memory_space<vmem>>, vector<32x8xbf16>
    %cst = arith.constant dense<0.000000e+00> : vector<32x2xf32>
    %2 = tpu.matmul %1, %0, %cst {dimension_numbers = #tpu.dot_dimension_numbers<[1], [0], [0], [1], [0, 0, 1, 1], [], []>} : vector<32x8xbf16>, vector<8x2xbf16>, vector<32x2xf32> -> vector<32x2xf32>
    %c0_3 = arith.constant 0 : index
    %c0_4 = arith.constant 0 : index
    %3 = vector.load %arg3[%c0_3, %c0_4] : memref<32x1xf32, #tpu.memory_space<vmem>>, vector<32x1xf32>
    %4 = vector.broadcast %3 : vector<32x1xf32> to vector<32x2xf32>
    %5 = arith.addf %2, %4 : vector<32x2xf32>
    %cst_5 = arith.constant 0.000000e+00 : f32
    %6 = vector.broadcast %cst_5 : f32 to vector<32x2xf32>
    %7 = arith.maximumf %5, %6 : vector<32x2xf32>
    %c0_6 = arith.constant 0 : index
    %c0_7 = arith.constant 0 : index
    %8 = vector.load %arg4[%c0_6, %c0_7] : memref<32x32xbf16, #tpu.memory_space<vmem>>, vector<32x32xbf16>
    %9 = arith.truncf %7 : vector<32x2xf32> to vector<32x2xbf16>
    %cst_8 = arith.constant dense<0.000000e+00> : vector<32x2xf32>
    %10 = tpu.matmul %8, %9, %cst_8 {dimension_numbers = #tpu.dot_dimension_numbers<[1], [0], [0], [1], [0, 0, 1, 1], [], []>} : vector<32x32xbf16>, vector<32x2xbf16>, vector<32x2xf32> -> vector<32x2xf32>
    %c0_9 = arith.constant 0 : index
    %c0_10 = arith.constant 0 : index
    %11 = vector.load %arg5[%c0_9, %c0_10] : memref<32x1xf32, #tpu.memory_space<vmem>>, vector<32x1xf32>
    %12 = vector.broadcast %11 : vector<32x1xf32> to vector<32x2xf32>
    %13 = arith.addf %10, %12 : vector<32x2xf32>
    %cst_11 = arith.constant 0.000000e+00 : f32
    %14 = vector.broadcast %cst_11 : f32 to vector<32x2xf32>
    %15 = arith.maximumf %13, %14 : vector<32x2xf32>
    %c0_12 = arith.constant 0 : index
    %c0_13 = arith.constant 0 : index
    %16 = vector.load %arg6[%c0_12, %c0_13] : memref<4x32xbf16, #tpu.memory_space<vmem>>, vector<4x32xbf16>
    %17 = arith.truncf %15 : vector<32x2xf32> to vector<32x2xbf16>
    %cst_14 = arith.constant dense<0.000000e+00> : vector<4x2xf32>
    %18 = tpu.matmul %16, %17, %cst_14 {dimension_numbers = #tpu.dot_dimension_numbers<[1], [0], [0], [1], [0, 0, 1, 1], [], []>} : vector<4x32xbf16>, vector<32x2xbf16>, vector<4x2xf32> -> vector<4x2xf32>
    %c0_15 = arith.constant 0 : index
    %c0_16 = arith.constant 0 : index
    %19 = vector.load %arg7[%c0_15, %c0_16] : memref<4x1xf32, #tpu.memory_space<vmem>>, vector<4x1xf32>
    %20 = vector.broadcast %19 : vector<4x1xf32> to vector<4x2xf32>
    %21 = arith.addf %18, %20 : vector<4x2xf32>
    %c0_17 = arith.constant 0 : index
    %c0_18 = arith.constant 0 : index
    %22 = vector.load %arg8[%c0_17, %c0_18] : memref<4x2xf32, #tpu.memory_space<vmem>>, vector<4x2xf32>
    tpu.vector_store %arg8[%c0_17, %c0_18], %21 {strides = array<i32>} : memref<4x2xf32, #tpu.memory_space<vmem>>, vector<4x2xf32>,
    return
  }
  func.func @transform_0(%arg0: i32) -> (i32, i32) {
    %c0_i32 = arith.constant 0 : i32
    %c0_i32_0 = arith.constant 0 : i32
    return %c0_i32, %arg0 : i32, i32
  }
  func.func @transform_1(%arg0: i32) -> (i32, i32) {
    %c0_i32 = arith.constant 0 : i32
    %c0_i32_0 = arith.constant 0 : i32
    %c0_i32_1 = arith.constant 0 : i32
    return %c0_i32, %c0_i32_0 : i32, i32
  }
  func.func @transform_2(%arg0: i32) -> (i32, i32) {
    %c0_i32 = arith.constant 0 : i32
    %c0_i32_0 = arith.constant 0 : i32
    %c0_i32_1 = arith.constant 0 : i32
    return %c0_i32, %c0_i32_0 : i32, i32
  }
  func.func @transform_3(%arg0: i32) -> (i32, i32) {
    %c0_i32 = arith.constant 0 : i32
    %c0_i32_0 = arith.constant 0 : i32
    %c0_i32_1 = arith.constant 0 : i32
    return %c0_i32, %c0_i32_0 : i32, i32
  }
  func.func @transform_4(%arg0: i32) -> (i32, i32) {
    %c0_i32 = arith.constant 0 : i32
    %c0_i32_0 = arith.constant 0 : i32
    %c0_i32_1 = arith.constant 0 : i32
    return %c0_i32, %c0_i32_0 : i32, i32
  }
  func.func @transform_5(%arg0: i32) -> (i32, i32) {
    %c0_i32 = arith.constant 0 : i32
    %c0_i32_0 = arith.constant 0 : i32
    %c0_i32_1 = arith.constant 0 : i32
    return %c0_i32, %c0_i32_0 : i32, i32
  }
  func.func @transform_6(%arg0: i32) -> (i32, i32) {
    %c0_i32 = arith.constant 0 : i32
    %c0_i32_0 = arith.constant 0 : i32
    %c0_i32_1 = arith.constant 0 : i32
    return %c0_i32, %c0_i32_0 : i32, i32
  }
  func.func @transform_7(%arg0: i32) -> (i32, i32) {
    %c0_i32 = arith.constant 0 : i32
    %c0_i32_0 = arith.constant 0 : i32
    return %c0_i32, %arg0 : i32, i32
  }
}

</mosaic_0001>

<llo_original>
// kernel: tpu_custom_call.1
$region0: #{tpu_custom_call.1}
  #allocation0 [shape = 'u32[]', space=smem, size = 0x4, offset = 0x4, fixed_abs, tag = 'smem constant byte address 0x4 - core index']
  #allocation1 [shape = 'u32[144,128]{1,0:T(1,128)}', space=vmem, size = 0x12000, scoped, tag = 'internal scratch']
  %s0 = inlined_call_operand.vmem [shape: bf16[8,2], index: 0, kind: input, shape index: {}]
  %s1 = inlined_call_operand.vmem [shape: bf16[32,8], index: 1, kind: input, shape index: {}]
  %s2 = inlined_call_operand.vmem [shape: f32[32,1], index: 2, kind: input, shape index: {}]
  %s3 = inlined_call_operand.vmem [shape: bf16[32,32], index: 3, kind: input, shape index: {}]
  %s4 = inlined_call_operand.vmem [shape: f32[32,1], index: 4, kind: input, shape index: {}]
  %s5 = inlined_call_operand.vmem [shape: bf16[4,32], index: 5, kind: input, shape index: {}]
  %s6 = inlined_call_operand.vmem [shape: f32[4,1], index: 6, kind: input, shape index: {}]
  %s7 = inlined_call_operand.vmem [shape: f32[4,2], index: 7, kind: output, shape index: {}]
  %s8 = sld [smem:[#allocation0]]
  $region38: #{tpu_custom_call.1} parent=0
    _
  %s10 = ssub.s32 1, %s8
  %s11 = scalar_select 0, %s10, %s8
  // Predicated region
  $region2: #{tpu_custom_call.1} parent=0 // pred_check
    _
  $region3: #{tpu_custom_call.1} parent=0 // pred_check_branch
    %13 = sbr.rel (0) target = $region5
  $region4: #{tpu_custom_call.1} parent=0 // pred_region
    _
  $region5: #{tpu_custom_call.1} parent=0 // pred_fallthru
    _
  // Predicated region
  $region6: #{tpu_custom_call.1} parent=0 // pred_check
    _
  $region7: #{tpu_custom_call.1} parent=0 // pred_check_branch
    %15 = sbr.rel (0) target = $region9
  $region8: #{tpu_custom_call.1} parent=0 // pred_region
    _
  $region9: #{tpu_custom_call.1} parent=0 // pred_fallthru
    _
  // Predicated region
  $region10: #{tpu_custom_call.1} parent=0 // pred_check
    _
  $region11: #{tpu_custom_call.1} parent=0 // pred_check_branch
    %17 = sbr.rel (0) target = $region13
  $region12: #{tpu_custom_call.1} parent=0 // pred_region
    _
  $region13: #{tpu_custom_call.1} parent=0 // pred_fallthru
    _
  // Predicated region
  $region14: #{tpu_custom_call.1} parent=0 // pred_check
    _
  $region15: #{tpu_custom_call.1} parent=0 // pred_check_branch
    %19 = sbr.rel (0) target = $region17
  $region16: #{tpu_custom_call.1} parent=0 // pred_region
    _
  $region17: #{tpu_custom_call.1} parent=0 // pred_fallthru
    _
  // Predicated region
  $region18: #{tpu_custom_call.1} parent=0 // pred_check
    _
  $region19: #{tpu_custom_call.1} parent=0 // pred_check_branch
    %21 = sbr.rel (0) target = $region21
  $region20: #{tpu_custom_call.1} parent=0 // pred_region
    _
  $region21: #{tpu_custom_call.1} parent=0 // pred_fallthru
    _
  // Predicated region
  $region22: #{tpu_custom_call.1} parent=0 // pred_check
    _
  $region23: #{tpu_custom_call.1} parent=0 // pred_check_branch
    %23 = sbr.rel (0) target = $region25
  $region24: #{tpu_custom_call.1} parent=0 // pred_region
    _
  $region25: #{tpu_custom_call.1} parent=0 // pred_fallthru
    _
  // Predicated region
  $region26: #{tpu_custom_call.1} parent=0 // pred_check
    _
  $region27: #{tpu_custom_call.1} parent=0 // pred_check_branch
    %25 = sbr.rel (0) target = $region29
  $region28: #{tpu_custom_call.1} parent=0 // pred_region
    _
  $region29: #{tpu_custom_call.1} parent=0 // pred_fallthru
    _
  %v27 = vld [vmem:[%s0] sm:$0xf]
  %v28 = vld [vmem:[%s1] sm:$0xf]
  %v29 = vld [vmem:[%s1 + $0x4] sm:$0xf]
  %v30 = vld [vmem:[%s1 + $0x8] sm:$0xf]
  %v31 = vld [vmem:[%s1 + $0xc] sm:$0xf]
  %v32 = vld [vmem:[%s2] sm:$0xff]
  %v33 = vld [vmem:[%s2 + $0x8] sm:$0xff]
  %v34 = vld [vmem:[%s2 + $0x10] sm:$0xff]
  %v35 = vld [vmem:[%s2 + $0x18] sm:$0xff]
  %37 = vset.pattern.permute.xlu0 0
  %38 = vperm.xlu0 %37, %v32
  %v39 = vpop.permute.xlu0 %38
  %42 = vset.pattern.permute.xlu0 0
  %43 = vperm.xlu0 %42, %v33
  %v44 = vpop.permute.xlu0 %43
  %47 = vset.pattern.permute.xlu0 0
  %48 = vperm.xlu0 %47, %v34
  %v49 = vpop.permute.xlu0 %48
  %52 = vset.pattern.permute.xlu0 0
  %53 = vperm.xlu0 %52, %v35
  %v54 = vpop.permute.xlu0 %53
  %v60 = vunpack.c.l.b16 %v28
  %v61 = vunpack.c.l.b16 %v29
  %v62 = vunpack.c.l.b16 %v30
  %v63 = vunpack.c.l.b16 %v31
  %v64 = vpack.c.b16 %v61, %v60
  %v65 = vpack.c.b16 %v63, %v62
  %vm66 = vcmask 64512
  %v68 = vsel %vm66, %v64, 0
  %v71 = vsel %vm66, %v65, 0
  %vm73 = vcmask 1043456
  %v75 = vsel %vm73, %v27, 0
  %77 = vmatprep.subr.bf16.mxu0 0
  %78 = vmatpush1.bf16.msra.mxu0 %v75
  %79 = vmatprep.subr.bf16.mxu0 0
  %80 = vmatpush1.bf16.msra.mxu0 0
  %81 = vmatprep.subr.bf16.mxu0 0
  %82 = vmatpush1.bf16.msra.mxu0 0
  %83 = vmatprep.subr.bf16.mxu0 0
  %84 = vmatpush1.bf16.msra.mxu0 0
  %85 = vmatprep.subr.bf16.mxu0 0
  %86 = vmatpush1.bf16.msra.mxu0 0
  %87 = vmatprep.subr.bf16.mxu0 0
  %88 = vmatpush1.bf16.msra.mxu0 0
  %89 = vmatprep.subr.bf16.mxu0 0
  %90 = vmatpush1.bf16.msra.mxu0 0
  %91 = vmatprep.subr.bf16.mxu0 0
  %92 = vmatpush1.bf16.msra.mxu0 0
  %93 = vmatprep.subr.bf16.mxu0 0
  %94 = vmatpush1.bf16.msra.mxu0 0
  %95 = vmatprep.subr.bf16.mxu0 0
  %96 = vmatpush1.bf16.msra.mxu0 0
  %97 = vmatprep.subr.bf16.mxu0 0
  %98 = vmatpush1.bf16.msra.mxu0 0
  %99 = vmatprep.subr.bf16.mxu0 0
  %100 = vmatpush1.bf16.msra.mxu0 0
  %101 = vmatprep.subr.bf16.mxu0 0
  %102 = vmatpush1.bf16.msra.mxu0 0
  %103 = vmatprep.subr.bf16.mxu0 0
  %104 = vmatpush1.bf16.msra.mxu0 0
  %105 = vmatprep.subr.bf16.mxu0 0
  %106 = vmatpush1.bf16.msra.mxu0 0
  %107 = vmatprep.subr.bf16.mxu0 0
  %108 = vmatpush1.bf16.msra.mxu0 0
  %109 = vmatprep.mubr.bf16.mxu0 0
  %110 = vmatmul.mubr.bf16.gmra.mrb[0].mxu0 %v68
  %v111 = vpop.f32.mrb[0].mxu0
  %v112 = vadd.f32 %v39, %v111
  %v113 = vpop.f32.mrb[0].mxu0
  %v114 = vpop.f32.mrb[0].mxu0
  %v115 = vadd.f32 %v44, %v114
  %v116 = vpop.f32.mrb[0].mxu0
  %117 = vmatprep.mubr.bf16.mxu0 0
  %118 = vmatmul.mubr.bf16.gmra.mrb[0].mxu0 %v71
  %v119 = vpop.f32.mrb[0].mxu0
  %v120 = vadd.f32 %v49, %v119
  %v121 = vpop.f32.mrb[0].mxu0
  %v122 = vpop.f32.mrb[0].mxu0
  %v123 = vadd.f32 %v54, %v122
  %v124 = vpop.f32.mrb[0].mxu0
  %125 = vdwg.mxu0
  %v126 = vmax.f32 %v112, 0.0
  %v127 = vmax.f32 %v115, 0.0
  %v128 = vmax.f32 %v120, 0.0
  %v129 = vmax.f32 %v123, 0.0
  %v130 = vld [vmem:[%s3] sm:$0xf]
  %v131 = vld [vmem:[%s3 + $0x4] sm:$0xf]
  %v132 = vld [vmem:[%s3 + $0x8] sm:$0xf]
  %v133 = vld [vmem:[%s3 + $0xc] sm:$0xf]
  %v134 = vpack.c.bf16 %v127, %v126
  %v135 = vpack.c.bf16 %v129, %v128
  %v136 = vld [vmem:[%s4] sm:$0xff]
  %v137 = vld [vmem:[%s4 + $0x8] sm:$0xff]
  %v138 = vld [vmem:[%s4 + $0x10] sm:$0xff]
  %v139 = vld [vmem:[%s4 + $0x18] sm:$0xff]
  %141 = vset.pattern.permute.xlu0 0
  %142 = vperm.xlu0 %141, %v136
  %v143 = vpop.permute.xlu0 %142
  %146 = vset.pattern.permute.xlu0 0
  %147 = vperm.xlu0 %146, %v137
  %v148 = vpop.permute.xlu0 %147
  %151 = vset.pattern.permute.xlu0 0
  %152 = vperm.xlu0 %151, %v138
  %v153 = vpop.permute.xlu0 %152
  %156 = vset.pattern.permute.xlu0 0
  %157 = vperm.xlu0 %156, %v139
  %v158 = vpop.permute.xlu0 %157
  %v164 = vunpack.c.l.b16 %v130
  %v165 = vunpack.c.l.b16 %v131
  %v166 = vunpack.c.l.b16 %v132
  %v167 = vunpack.c.l.b16 %v133
  %v168 = vpack.c.b16 %v165, %v164
  %v169 = vpack.c.b16 %v167, %v166
  %vm170 = vcmask 261120
  %v172 = vsel %vm170, %v168, 0
  %v175 = vsel %vm170, %v169, 0
  %177 = vmatprep.subr.bf16.mxu0 0
  %178 = vmatpush1.bf16.msra.mxu0 %v134
  %179 = vmatprep.subr.bf16.mxu0 0
  %180 = vmatpush1.bf16.msra.mxu0 %v135
  %181 = vmatprep.subr.bf16.mxu0 0
  %182 = vmatpush1.bf16.msra.mxu0 0
  %183 = vmatprep.subr.bf16.mxu0 0
  %184 = vmatpush1.bf16.msra.mxu0 0
  %185 = vmatprep.subr.bf16.mxu0 0
  %186 = vmatpush1.bf16.msra.mxu0 0
  %187 = vmatprep.subr.bf16.mxu0 0
  %188 = vmatpush1.bf16.msra.mxu0 0
  %189 = vmatprep.subr.bf16.mxu0 0
  %190 = vmatpush1.bf16.msra.mxu0 0
  %191 = vmatprep.subr.bf16.mxu0 0
  %192 = vmatpush1.bf16.msra.mxu0 0
  %193 = vmatprep.subr.bf16.mxu0 0
  %194 = vmatpush1.bf16.msra.mxu0 0
  %195 = vmatprep.subr.bf16.mxu0 0
  %196 = vmatpush1.bf16.msra.mxu0 0
  %197 = vmatprep.subr.bf16.mxu0 0
  %198 = vmatpush1.bf16.msra.mxu0 0
  %199 = vmatprep.subr.bf16.mxu0 0
  %200 = vmatpush1.bf16.msra.mxu0 0
  %201 = vmatprep.subr.bf16.mxu0 0
  %202 = vmatpush1.bf16.msra.mxu0 0
  %203 = vmatprep.subr.bf16.mxu0 0
  %204 = vmatpush1.bf16.msra.mxu0 0
  %205 = vmatprep.subr.bf16.mxu0 0
  %206 = vmatpush1.bf16.msra.mxu0 0
  %207 = vmatprep.subr.bf16.mxu0 0
  %208 = vmatpush1.bf16.msra.mxu0 0
  %209 = vmatprep.mubr.bf16.mxu0 0
  %210 = vmatmul.mubr.bf16.gmra.mrb[0].mxu0 %v172
  %v211 = vpop.f32.mrb[0].mxu0
  %v212 = vadd.f32 %v143, %v211
  %v213 = vpop.f32.mrb[0].mxu0
  %v214 = vpop.f32.mrb[0].mxu0
  %v215 = vadd.f32 %v148, %v214
  %v216 = vpop.f32.mrb[0].mxu0
  %217 = vmatprep.mubr.bf16.mxu0 0
  %218 = vmatmul.mubr.bf16.gmra.mrb[0].mxu0 %v175
  %v219 = vpop.f32.mrb[0].mxu0
  %v220 = vadd.f32 %v153, %v219
  %v221 = vpop.f32.mrb[0].mxu0
  %v222 = vpop.f32.mrb[0].mxu0
  %v223 = vadd.f32 %v158, %v222
  %v224 = vpop.f32.mrb[0].mxu0
  %225 = vdwg.mxu0
  %v226 = vmax.f32 %v212, 0.0
  %v227 = vmax.f32 %v215, 0.0
  %v228 = vmax.f32 %v220, 0.0
  %v229 = vmax.f32 %v223, 0.0
  %v230 = vld [vmem:[%s5] sm:$0x3]
  %v231 = vpack.c.bf16 %v227, %v226
  %v232 = vpack.c.bf16 %v229, %v228
  %v233 = vld [vmem:[%s6] sm:$0xf]
  %235 = vset.pattern.permute.xlu0 0
  %236 = vperm.xlu0 %235, %v233
  %v237 = vpop.permute.xlu0 %236
  %v240 = vsel %vm170, %v230, 0
  %242 = vmatprep.subr.bf16.mxu0 0
  %243 = vmatpush1.bf16.msra.mxu0 %v231
  %244 = vmatprep.subr.bf16.mxu0 0
  %245 = vmatpush1.bf16.msra.mxu0 %v232
  %246 = vmatprep.subr.bf16.mxu0 0
  %247 = vmatpush1.bf16.msra.mxu0 0
  %248 = vmatprep.subr.bf16.mxu0 0
  %249 = vmatpush1.bf16.msra.mxu0 0
  %250 = vmatprep.subr.bf16.mxu0 0
  %251 = vmatpush1.bf16.msra.mxu0 0
  %252 = vmatprep.subr.bf16.mxu0 0
  %253 = vmatpush1.bf16.msra.mxu0 0
  %254 = vmatprep.subr.bf16.mxu0 0
  %255 = vmatpush1.bf16.msra.mxu0 0
  %256 = vmatprep.subr.bf16.mxu0 0
  %257 = vmatpush1.bf16.msra.mxu0 0
  %258 = vmatprep.subr.bf16.mxu0 0
  %259 = vmatpush1.bf16.msra.mxu0 0
  %260 = vmatprep.subr.bf16.mxu0 0
  %261 = vmatpush1.bf16.msra.mxu0 0
  %262 = vmatprep.subr.bf16.mxu0 0
  %263 = vmatpush1.bf16.msra.mxu0 0
  %264 = vmatprep.subr.bf16.mxu0 0
  %265 = vmatpush1.bf16.msra.mxu0 0
  %266 = vmatprep.subr.bf16.mxu0 0
  %267 = vmatpush1.bf16.msra.mxu0 0
  %268 = vmatprep.subr.bf16.mxu0 0
  %269 = vmatpush1.bf16.msra.mxu0 0
  %270 = vmatprep.subr.bf16.mxu0 0
  %271 = vmatpush1.bf16.msra.mxu0 0
  %272 = vmatprep.subr.bf16.mxu0 0
  %273 = vmatpush1.bf16.msra.mxu0 0
  %274 = vmatprep.mubr.bf16.mxu0 0
  %275 = vmatmul.mubr.bf16.gmra.mrb[0].mxu0 %v240
  %v276 = vpop.f32.mrb[0].mxu0
  %v277 = vadd.f32 %v237, %v276
  %v278 = vpop.f32.mrb[0].mxu0
  %v279 = vpop.f32.mrb[0].mxu0
  %v280 = vpop.f32.mrb[0].mxu0
  %281 = vdwg.mxu0
  %vm282 = vcmask 11264
  %283 = vst.msk [vmem:[%s7] sm:$0xf] %vm282, %v277
  // Predicated region
  $region30: #{tpu_custom_call.1} parent=0 // pred_check
    _
  $region31: #{tpu_custom_call.1} parent=0 // pred_check_branch
    %285 = sbr.rel (0) target = $region33
  $region32: #{tpu_custom_call.1} parent=0 // pred_region
    _
  $region33: #{tpu_custom_call.1} parent=0 // pred_fallthru
    _
  // Predicated region
  $region34: #{tpu_custom_call.1} parent=0 // pred_check
    _
  $region35: #{tpu_custom_call.1} parent=0 // pred_check_branch
    %287 = sbr.rel (0) target = $region37
  $region36: #{tpu_custom_call.1} parent=0 // pred_region
    _
  $region37: #{tpu_custom_call.1} parent=0 // pred_fallthru
    _

</llo_original>
